<compile_context>
chip_gen: v6e
topology: v6e:2x2x1
jax: 0.10.0
libtpu: 0.0.40
codegen_flags: <defaults>
</compile_context>

<pallas_src>
import jax
import jax.numpy as jnp
from jax.experimental import pallas as pl
from jax.experimental.pallas import tpu as pltpu


def _round_up(x, m):
    return ((x + m - 1) // m) * m


def _num_tensorcores():
    """v7x has 2 TensorCores per chip; v4/v5e/v6e expose 1 per device.
    Conservative default (2) only shrinks the batch tile slightly."""
    try:
        kind = jax.devices()[0].device_kind.lower()
    except Exception:
        return 2
    if "v4" in kind or "v5" in kind or "v6" in kind:
        return 1
    return 2


def fc_head2_kernel(x_ref, wt_ref, b_ref, o_ref):
    """x_ref: (TILE_B, F) feats; wt_ref: (F, OUT_PAD) pool-folded weight;
       b_ref: (1, OUT_PAD) f32 bias; o_ref: (TILE_B, OUT_PAD) output."""
    o_ref[...] = (
        jnp.dot(x_ref[...], wt_ref[...], preferred_element_type=jnp.float32)
        + b_ref[...]
    ).astype(o_ref.dtype)


def prepare_fc_head_2_params(fc_weight, fc_bias, *, pool=4, feats_dtype=jnp.bfloat16):
    """One-time prep (frozen Linear): fold AvgPool1d(pool, pool) into the weight,
    pad the output dim to a multiple of 128 lanes, cast weight to feats dtype."""
    out_num, in_num = fc_weight.shape
    out_pad = max(128, _round_up(out_num, 128))
    # pooled @ W.T == feats @ W_fold  with  W_fold[f, o] = W[o, f // pool] / pool
    w_fold = jnp.repeat(jnp.asarray(fc_weight, jnp.float32).T, pool, axis=0) / pool
    w_fold = jnp.pad(w_fold, ((0, 0), (0, out_pad - out_num))).astype(feats_dtype)
    bias_pad = jnp.pad(jnp.asarray(fc_bias, jnp.float32).reshape(1, out_num),
                       ((0, 0), (0, out_pad - out_num)))
    return w_fold, bias_pad, out_num


def fc_head_2_forward(feats, w_fold, bias_pad, out_num, *,
                      tile_b=None, force_pallas=False, out_dtype=None):
    """fc_head_2.forward: unsqueeze -> AvgPool1d(4,4) -> squeeze -> Linear,
    with the pool folded into the (pre-prepared) weight."""
    B, F = feats.shape
    Fw, OUT_PAD = w_fold.shape
    assert F == Fw, "feats dim must equal pool * Linear input_num"
    out_dtype = feats.dtype if out_dtype is None else out_dtype

    # Tiny batches: less than one MXU-worth of rows -> a fused XLA dot matches
    # or beats the pallas_call (which would be pure launch/DMA-prologue cost).
    if B < 128 and not force_pallas:
        acc = jnp.dot(feats, w_fold, preferred_element_type=jnp.float32) + bias_pad
        return acc[:, :out_num].astype(out_dtype)

    x_isz = jnp.dtype(feats.dtype).itemsize
    w_isz = jnp.dtype(w_fold.dtype).itemsize
    o_isz = jnp.dtype(out_dtype).itemsize
    sub = 16 if x_isz < 4 else 8          # bf16 packs 16 rows per sublane vreg

    # ---- VMEM-derived batch-tile cap (safe on v7x's 64 MiB physical VMEM) ----
    VMEM_CAP = 48 << 20
    # weight + bias counted double-buffered (their block index is constant, so
    # only one copy is ever refilled, but budget conservatively) + headroom.
    fixed_bytes = 2 * F * OUT_PAD * w_isz + 2 * OUT_PAD * 4 + (4 << 20)
    per_row = 2 * F * x_isz + 2 * OUT_PAD * o_isz   # dbl-buffered feats + out
    tile_cap = max(sub, ((VMEM_CAP - fixed_bytes) // per_row) // sub * sub)
    tile_cap = min(tile_cap, 1024)        # 512-1024 already ~85% of HBM roofline

    if tile_b is None:
        if _num_tensorcores() > 1:
            # keep ~8 grid blocks when the batch allows (megacore sharding +
            # pipelining) but never drop below 256 rows (roofline efficiency).
            target = max(256, _round_up(pl.cdiv(B, 8), sub))
        else:
            target = tile_cap             # single TC: take the biggest tile
        tile_b = min(tile_cap, target, _round_up(B, sub))
    tile_b = max(sub, _round_up(min(tile_b, tile_cap), sub))

    # No host-side jnp.pad of feats: ragged last block handled by Pallas
    # boundary masking (OOB input rows only feed output rows that are dropped).
    grid = (pl.cdiv(B, tile_b),)

    cost = pl.CostEstimate(
        flops=2 * B * F * OUT_PAD,
        transcendentals=0,
        bytes_accessed=(B * F * x_isz
                        + F * OUT_PAD * w_isz
                        + OUT_PAD * 4
                        + B * OUT_PAD * o_isz))

    vmem_bytes = int(min(VMEM_CAP, max(8 << 20, fixed_bytes + tile_b * per_row)))

    out = pl.pallas_call(
        fc_head2_kernel,
        out_shape=jax.ShapeDtypeStruct((B, OUT_PAD), out_dtype),
        grid=grid,
        in_specs=[
            pl.BlockSpec((tile_b, F), lambda i: (i, 0)),
            pl.BlockSpec((F, OUT_PAD), lambda i: (0, 0)),
            pl.BlockSpec((1, OUT_PAD), lambda i: (0, 0)),
        ],
        out_specs=pl.BlockSpec((tile_b, OUT_PAD), lambda i: (i, 0)),
        compiler_params=pltpu.CompilerParams(
            dimension_semantics=("parallel",),
            vmem_limit_bytes=vmem_bytes),
        cost_estimate=cost,
    )(feats, w_fold, bias_pad)

    return out[:, :out_num]


def classifier_2_forward(feats, w_fold, bias_pad, out_num):
    """classifier_2.forward with the (external, frozen) encoder elided:
       pred = fc_head(feats).  Auto-dispatches XLA-dot for tiny batches."""
    return fc_head_2_forward(feats, w_fold, bias_pad, out_num)


def reference_forward(feats_f32, fc_weight, fc_bias):
    """Pure-jnp reference mirroring the PyTorch module (f32 math)."""
    B, F = feats_f32.shape
    pooled = feats_f32.reshape(B, F // 4, 4).mean(axis=-1)   # AvgPool1d(4,4)
    return pooled @ fc_weight.T + fc_bias                    # Linear


if __name__ == "__main__":
    # Small shapes consistent with the module: feats dim F, Linear(in=F//4, out)
    B = 2
    INPUT_NUM = 128          # fc_head_2 Linear input_num (default 512; small here)
    F = 4 * INPUT_NUM        # encoder feature dim seen by AvgPool1d(4,4)
    OUTPUT_NUM = 10

    key = jax.random.PRNGKey(0)
    k_feat, k_w, k_b = jax.random.split(key, 3)

    # Encoder features in bf16 (typical encoder output dtype); no f32 upcast.
    feats = jax.random.normal(k_feat, (B, F), dtype=jnp.float32).astype(jnp.bfloat16)

    # Deterministic Linear params (uniform(-1/sqrt(in), 1/sqrt(in)) like torch default)
    bound = 1.0 / (INPUT_NUM ** 0.5)
    fc_weight = jax.random.uniform(k_w, (OUTPUT_NUM, INPUT_NUM),
                                   minval=-bound, maxval=bound, dtype=jnp.float32)
    fc_bias = jax.random.uniform(k_b, (OUTPUT_NUM,),
                                 minval=-bound, maxval=bound, dtype=jnp.float32)

    # One-time parameter prep (frozen weights): fold pool, pad lanes, cast.
    w_fold, bias_pad, out_num = prepare_fc_head_2_params(
        fc_weight, fc_bias, pool=4, feats_dtype=feats.dtype)

    # Run the Pallas kernel path (forced: the auto-dispatch would route this
    # tiny batch to the XLA-dot fallback).
    pred = fc_head_2_forward(feats, w_fold, bias_pad, out_num, force_pallas=True)
    pred = jax.block_until_ready(pred)

    # Auto-dispatch path (classifier_2.forward semantics) for comparison.
    pred_auto = jax.block_until_ready(
        classifier_2_forward(feats, w_fold, bias_pad, out_num))

    ref = reference_forward(feats.astype(jnp.float32), fc_weight, fc_bias)
    assert pred.shape == (B, OUTPUT_NUM)
    assert jnp.allclose(pred.astype(jnp.float32), ref, atol=3e-2, rtol=3e-2), \
        "pallas path mismatch vs reference"
    assert jnp.allclose(pred_auto.astype(jnp.float32), ref, atol=3e-2, rtol=3e-2), \
        "fallback path mismatch vs reference"

    print("KERNEL_OK")
</pallas_src>

<mosaic_0001>
module attributes {stable_mosaic.version = 11 : i64} {
  func.func @fc_head2_kernel(%arg0: i32, %arg1: memref<16x512xbf16, #tpu.memory_space<vmem>>, %arg2: memref<512x128xbf16, #tpu.memory_space<vmem>>, %arg3: memref<1x128xf32, #tpu.memory_space<vmem>>, %arg4: memref<16x128xbf16, #tpu.memory_space<vmem>>) attributes {dimension_semantics = [#tpu.dimension_semantics<parallel>], iteration_bounds = array<i64: 1>, scalar_prefetch = 0 : i64, scratch_operands = 0 : i64, tpu.core_type = #tpu.core_type<tc>, window_params = [{transform_indices = @transform_0, window_bounds = array<i64: 16, 512>}, {pipeline_mode = #tpu.pipeline_mode<synchronous>, transform_indices = @transform_1, window_bounds = array<i64: 512, 128>}, {pipeline_mode = #tpu.pipeline_mode<synchronous>, transform_indices = @transform_2, window_bounds = array<i64: 1, 128>}, {transform_indices = @transform_3, window_bounds = array<i64: 16, 128>}]} {
    %c0 = arith.constant 0 : index
    %c0_0 = arith.constant 0 : index
    %0 = vector.load %arg1[%c0, %c0_0] : memref<16x512xbf16, #tpu.memory_space<vmem>>, vector<16x512xbf16>
    %c0_1 = arith.constant 0 : index
    %c0_2 = arith.constant 0 : index
    %1 = vector.load %arg2[%c0_1, %c0_2] : memref<512x128xbf16, #tpu.memory_space<vmem>>, vector<512x128xbf16>
    %cst = arith.constant dense<0.000000e+00> : vector<16x128xf32>
    %2 = tpu.matmul %0, %1, %cst {dimension_numbers = #tpu.dot_dimension_numbers<[1], [0], [0], [1], [0, 0, 1, 1], [], []>} : vector<16x512xbf16>, vector<512x128xbf16>, vector<16x128xf32> -> vector<16x128xf32>
    %c0_3 = arith.constant 0 : index
    %c0_4 = arith.constant 0 : index
    %3 = vector.load %arg3[%c0_3, %c0_4] : memref<1x128xf32, #tpu.memory_space<vmem>>, vector<1x128xf32>
    %4 = vector.broadcast %3 : vector<1x128xf32> to vector<16x128xf32>
    %5 = arith.addf %2, %4 : vector<16x128xf32>
    %6 = arith.truncf %5 : vector<16x128xf32> to vector<16x128xbf16>
    %c0_5 = arith.constant 0 : index
    %c0_6 = arith.constant 0 : index
    %7 = vector.load %arg4[%c0_5, %c0_6] : memref<16x128xbf16, #tpu.memory_space<vmem>>, vector<16x128xbf16>
    tpu.vector_store %arg4[%c0_5, %c0_6], %6 {strides = array<i32>} : memref<16x128xbf16, #tpu.memory_space<vmem>>, vector<16x128xbf16>,
    return
  }
  func.func @transform_0(%arg0: i32) -> (i32, i32) {
    %c0_i32 = arith.constant 0 : i32
    %c0_i32_0 = arith.constant 0 : i32
    return %arg0, %c0_i32 : i32, i32
  }
  func.func @transform_1(%arg0: i32) -> (i32, i32) {
    %c0_i32 = arith.constant 0 : i32
    %c0_i32_0 = arith.constant 0 : i32
    %c0_i32_1 = arith.constant 0 : i32
    return %c0_i32, %c0_i32_0 : i32, i32
  }
  func.func @transform_2(%arg0: i32) -> (i32, i32) {
    %c0_i32 = arith.constant 0 : i32
    %c0_i32_0 = arith.constant 0 : i32
    %c0_i32_1 = arith.constant 0 : i32
    return %c0_i32, %c0_i32_0 : i32, i32
  }
  func.func @transform_3(%arg0: i32) -> (i32, i32) {
    %c0_i32 = arith.constant 0 : i32
    %c0_i32_0 = arith.constant 0 : i32
    return %arg0, %c0_i32 : i32, i32
  }
}

</mosaic_0001>

<llo_original>
// kernel: tpu_custom_call.1
$region0: #{tpu_custom_call.1}
  #allocation0 [shape = 'u32[]', space=smem, size = 0x4, offset = 0x4, fixed_abs, tag = 'smem constant byte address 0x4 - core index']
  #allocation1 [shape = 'u32[144,128]{1,0:T(1,128)}', space=vmem, size = 0x12000, scoped, tag = 'internal scratch']
  %s0 = inlined_call_operand.hbm [shape: bf16[2,512], index: 0, kind: input, shape index: {}]
  %s1 = inlined_call_operand.hbm [shape: bf16[512,128], index: 1, kind: input, shape index: {}]
  %s2 = inlined_call_operand.vmem [shape: f32[1,128], index: 2, kind: input, shape index: {}]
  %s3 = inlined_call_operand.hbm [shape: bf16[2,128], index: 3, kind: output, shape index: {}]
  %s4 = sld [smem:[#allocation0]]
  $region30: #{tpu_custom_call.1} parent=0
    _
  %s6 = ssub.s32 1, %s4
  %s7 = scalar_select 0, %s6, %s4
  $region1: #{tpu_custom_call.1} parent=0
    #allocation2 [shape = 'u8[16384]{0}', space=vmem, size = 0x4000, scoped, tag = 'input window, operand 0, single buffered']
    #allocation3 [shape = 's32[1]{0}', space=sflag, size = 0x4, scoped, tag = 'scoped memory for tpu_custom_call.1']
    #allocation4 [shape = 's32[1]{0}', space=sflag, size = 0x4, scoped, tag = 'scoped memory for tpu_custom_call.1']
    #allocation5 [shape = 'u8[131072]{0}', space=vmem, size = 0x20000, scoped, tag = 'input window, operand 1, single buffered']
    #allocation6 [shape = 's32[1]{0}', space=sflag, size = 0x4, scoped, tag = 'scoped memory for tpu_custom_call.1']
    #allocation7 [shape = 'u8[4096]{0}', space=vmem, size = 0x1000, scoped, tag = 'output window, operand 0, single buffered']
    %8 = vsyncpa [#allocation3], 0
    %9 = vsyncpa [#allocation6], 0
    %10 = vsyncpa [#allocation4], 0
    // Predicated region
    $region2: #{tpu_custom_call.1} parent=1 // pred_check
      _
    $region3: #{tpu_custom_call.1} parent=1 // pred_check_branch
      %12 = sbr.rel (0) target = $region5
    $region4: #{tpu_custom_call.1} parent=1 // pred_region
      %s14 = ssub.s32 512, 64
      %15 = vsyncadd [#allocation3], %s14
      %s16 = sshll.u32 [#allocation2], 4
      %s17 = int_to_ptr.vmem [resolvable:$true] %s16
      %22 = dma.hbm_to_vmem [thread:$0]  %s0, 64, %s17, [#allocation3], 64, 64, 4
    $region5: #{tpu_custom_call.1} parent=1 // pred_fallthru
      _
    // Predicated region
    $region6: #{tpu_custom_call.1} parent=1 // pred_check
      _
    $region7: #{tpu_custom_call.1} parent=1 // pred_check_branch
      %24 = sbr.rel (0) target = $region9
    $region8: #{tpu_custom_call.1} parent=1 // pred_region
      %s26 = ssub.s32 4096, 4096
      %27 = vsyncadd [#allocation6], %s26
      %s28 = sshll.u32 [#allocation5], 4
      %s29 = int_to_ptr.vmem [resolvable:$true] %s28
      %34 = dma.hbm_to_vmem [thread:$0]  %s1, 4096, %s29, [#allocation6], 64, 64, 4
    $region9: #{tpu_custom_call.1} parent=1 // pred_fallthru
      _
    // Predicated region
    $region10: #{tpu_custom_call.1} parent=1 // pred_check
      _
    $region11: #{tpu_custom_call.1} parent=1 // pred_check_branch
      %36 = sbr.rel (0) target = $region13
    $region12: #{tpu_custom_call.1} parent=1 // pred_region
      _
    $region13: #{tpu_custom_call.1} parent=1 // pred_fallthru
      _
    // Predicated region
    $region14: #{tpu_custom_call.1} parent=1 // pred_check
      _
    $region15: #{tpu_custom_call.1} parent=1 // pred_check_branch
      %38 = sbr.rel (0) target = $region17
    $region16: #{tpu_custom_call.1} parent=1 // pred_region
      %39 = dma.done [#allocation3], 512
    $region17: #{tpu_custom_call.1} parent=1 // pred_fallthru
      _
    // Predicated region
    $region18: #{tpu_custom_call.1} parent=1 // pred_check
      _
    $region19: #{tpu_custom_call.1} parent=1 // pred_check_branch
      %41 = sbr.rel (0) target = $region21
    $region20: #{tpu_custom_call.1} parent=1 // pred_region
      %42 = dma.done [#allocation6], 4096
    $region21: #{tpu_custom_call.1} parent=1 // pred_fallthru
      _
    %v44 = vld [vmem:[#allocation2] sm:$0xf]
    %v45 = vld [vmem:[#allocation2 + $0x4] sm:$0xf]
    %v46 = vld [vmem:[#allocation2 + $0x8] sm:$0xf]
    %v47 = vld [vmem:[#allocation2 + $0xc] sm:$0xf]
    %v48 = vld [vmem:[#allocation2 + $0x10] sm:$0xf]
    %v49 = vld [vmem:[#allocation2 + $0x14] sm:$0xf]
    %v50 = vld [vmem:[#allocation2 + $0x18] sm:$0xf]
    %v51 = vld [vmem:[#allocation2 + $0x1c] sm:$0xf]
    %v52 = vld [vmem:[#allocation5] sm:$0xf]
    %v53 = vld [vmem:[#allocation5 + $0x4] sm:$0xf]
    %v54 = vld [vmem:[#allocation5 + $0x8] sm:$0xf]
    %v55 = vld [vmem:[#allocation5 + $0xc] sm:$0xf]
    %v56 = vld [vmem:[#allocation5 + $0x10] sm:$0xf]
    %v57 = vld [vmem:[#allocation5 + $0x14] sm:$0xf]
    %v58 = vld [vmem:[#allocation5 + $0x18] sm:$0xf]
    %v59 = vld [vmem:[#allocation5 + $0x1c] sm:$0xf]
    %v60 = vld [vmem:[#allocation5 + $0x20] sm:$0xf]
    %v61 = vld [vmem:[#allocation5 + $0x24] sm:$0xf]
    %v62 = vld [vmem:[#allocation5 + $0x28] sm:$0xf]
    %v63 = vld [vmem:[#allocation5 + $0x2c] sm:$0xf]
    %v64 = vld [vmem:[#allocation5 + $0x30] sm:$0xf]
    %v65 = vld [vmem:[#allocation5 + $0x34] sm:$0xf]
    %v66 = vld [vmem:[#allocation5 + $0x38] sm:$0xf]
    %v67 = vld [vmem:[#allocation5 + $0x3c] sm:$0xf]
    %v68 = vld [vmem:[#allocation5 + $0x40] sm:$0xf]
    %v69 = vld [vmem:[#allocation5 + $0x44] sm:$0xf]
    %v70 = vld [vmem:[#allocation5 + $0x48] sm:$0xf]
    %v71 = vld [vmem:[#allocation5 + $0x4c] sm:$0xf]
    %v72 = vld [vmem:[#allocation5 + $0x50] sm:$0xf]
    %v73 = vld [vmem:[#allocation5 + $0x54] sm:$0xf]
    %v74 = vld [vmem:[#allocation5 + $0x58] sm:$0xf]
    %v75 = vld [vmem:[#allocation5 + $0x5c] sm:$0xf]
    %v76 = vld [vmem:[#allocation5 + $0x60] sm:$0xf]
    %v77 = vld [vmem:[#allocation5 + $0x64] sm:$0xf]
    %v78 = vld [vmem:[#allocation5 + $0x68] sm:$0xf]
    %v79 = vld [vmem:[#allocation5 + $0x6c] sm:$0xf]
    %v80 = vld [vmem:[#allocation5 + $0x70] sm:$0xf]
    %v81 = vld [vmem:[#allocation5 + $0x74] sm:$0xf]
    %v82 = vld [vmem:[#allocation5 + $0x78] sm:$0xf]
    %v83 = vld [vmem:[#allocation5 + $0x7c] sm:$0xf]
    %v84 = vld [vmem:[#allocation5 + $0x80] sm:$0xf]
    %v85 = vld [vmem:[#allocation5 + $0x84] sm:$0xf]
    %v86 = vld [vmem:[#allocation5 + $0x88] sm:$0xf]
    %v87 = vld [vmem:[#allocation5 + $0x8c] sm:$0xf]
    %v88 = vld [vmem:[#allocation5 + $0x90] sm:$0xf]
    %v89 = vld [vmem:[#allocation5 + $0x94] sm:$0xf]
    %v90 = vld [vmem:[#allocation5 + $0x98] sm:$0xf]
    %v91 = vld [vmem:[#allocation5 + $0x9c] sm:$0xf]
    %v92 = vld [vmem:[#allocation5 + $0xa0] sm:$0xf]
    %v93 = vld [vmem:[#allocation5 + $0xa4] sm:$0xf]
    %v94 = vld [vmem:[#allocation5 + $0xa8] sm:$0xf]
    %v95 = vld [vmem:[#allocation5 + $0xac] sm:$0xf]
    %v96 = vld [vmem:[#allocation5 + $0xb0] sm:$0xf]
    %v97 = vld [vmem:[#allocation5 + $0xb4] sm:$0xf]
    %v98 = vld [vmem:[#allocation5 + $0xb8] sm:$0xf]
    %v99 = vld [vmem:[#allocation5 + $0xbc] sm:$0xf]
    %v100 = vld [vmem:[#allocation5 + $0xc0] sm:$0xf]
    %v101 = vld [vmem:[#allocation5 + $0xc4] sm:$0xf]
    %v102 = vld [vmem:[#allocation5 + $0xc8] sm:$0xf]
    %v103 = vld [vmem:[#allocation5 + $0xcc] sm:$0xf]
    %v104 = vld [vmem:[#allocation5 + $0xd0] sm:$0xf]
    %v105 = vld [vmem:[#allocation5 + $0xd4] sm:$0xf]
    %v106 = vld [vmem:[#allocation5 + $0xd8] sm:$0xf]
    %v107 = vld [vmem:[#allocation5 + $0xdc] sm:$0xf]
    %v108 = vld [vmem:[#allocation5 + $0xe0] sm:$0xf]
    %v109 = vld [vmem:[#allocation5 + $0xe4] sm:$0xf]
    %v110 = vld [vmem:[#allocation5 + $0xe8] sm:$0xf]
    %v111 = vld [vmem:[#allocation5 + $0xec] sm:$0xf]
    %v112 = vld [vmem:[#allocation5 + $0xf0] sm:$0xf]
    %v113 = vld [vmem:[#allocation5 + $0xf4] sm:$0xf]
    %v114 = vld [vmem:[#allocation5 + $0xf8] sm:$0xf]
    %v115 = vld [vmem:[#allocation5 + $0xfc] sm:$0xf]
    %v116 = vld [vmem:[%s2] sm:$0x1]
    %v118 = vlaneseq
    %v119 = vshrl.u32 %v118, 7
    %v120 = vsub.s32 0, %v119
    %v121 = vrot.slane %v116, %v120
    %v131 = vcombine.low %v44, %v45
    %v132 = vcombine.low %v46, %v47
    %v133 = vcombine.low %v48, %v49
    %v134 = vcombine.low %v50, %v51
    %v136 = vunpack.c.l.s4 1966171168
    %v137 = vunpack.c.0.s8 %v136
    %v138 = vlaneseq
    %v139 = vshrl.u32 %v138, 7
    %v140 = vsub.s32 %v137, %v139
    %v141 = vrot.slane %v131, %v140
    %v143 = vunpack.c.l.s4 1966171168
    %v144 = vunpack.c.0.s8 %v143
    %v145 = vlaneseq
    %v146 = vshrl.u32 %v145, 7
    %v147 = vsub.s32 %v144, %v146
    %v148 = vrot.slane %v132, %v147
    %v150 = vunpack.c.l.s4 1966171168
    %v151 = vunpack.c.0.s8 %v150
    %v152 = vlaneseq
    %v153 = vshrl.u32 %v152, 7
    %v154 = vsub.s32 %v151, %v153
    %v155 = vrot.slane %v133, %v154
    %v157 = vunpack.c.l.s4 1966171168
    %v158 = vunpack.c.0.s8 %v157
    %v159 = vlaneseq
    %v160 = vshrl.u32 %v159, 7
    %v161 = vsub.s32 %v158, %v160
    %v162 = vrot.slane %v134, %v161
    %v163 = vcombine.low %v141, %v148
    %v164 = vcombine.high %v141, %v148
    %v165 = vcombine.low %v155, %v162
    %v166 = vcombine.high %v155, %v162
    %v168 = vunpack.c.l.s4 1966171168
    %v169 = vunpack.c.0.s8 %v168
    %v170 = vlaneseq
    %v171 = vshrl.u32 %v170, 7
    %v172 = vsub.s32 %v169, %v171
    %v173 = vrot.slane %v163, %v172
    %v175 = vunpack.c.l.s4 1966171168
    %v176 = vunpack.c.0.s8 %v175
    %v177 = vlaneseq
    %v178 = vshrl.u32 %v177, 7
    %v179 = vsub.s32 %v176, %v178
    %v180 = vrot.slane %v164, %v179
    %v182 = vunpack.c.l.s4 1966171168
    %v183 = vunpack.c.0.s8 %v182
    %v184 = vlaneseq
    %v185 = vshrl.u32 %v184, 7
    %v186 = vsub.s32 %v183, %v185
    %v187 = vrot.slane %v165, %v186
    %v189 = vunpack.c.l.s4 1966171168
    %v190 = vunpack.c.0.s8 %v189
    %v191 = vlaneseq
    %v192 = vshrl.u32 %v191, 7
    %v193 = vsub.s32 %v190, %v192
    %v194 = vrot.slane %v166, %v193
    %v195 = vcombine.low %v173, %v187
    %v196 = vcombine.high %v173, %v187
    %v197 = vcombine.low %v180, %v194
    %v198 = vcombine.high %v180, %v194
    %v267 = vunpack.c.l.b16 %v52
    %v268 = vunpack.c.l.b16 %v53
    %v269 = vunpack.c.l.b16 %v54
    %v270 = vunpack.c.l.b16 %v55
    %v271 = vunpack.c.l.b16 %v56
    %v272 = vunpack.c.l.b16 %v57
    %v273 = vunpack.c.l.b16 %v58
    %v274 = vunpack.c.l.b16 %v59
    %v275 = vunpack.c.l.b16 %v60
    %v276 = vunpack.c.l.b16 %v61
    %v277 = vunpack.c.l.b16 %v62
    %v278 = vunpack.c.l.b16 %v63
    %v279 = vunpack.c.l.b16 %v64
    %v280 = vunpack.c.l.b16 %v65
    %v281 = vunpack.c.l.b16 %v66
    %v282 = vunpack.c.l.b16 %v67
    %v283 = vunpack.c.l.b16 %v68
    %v284 = vunpack.c.l.b16 %v69
    %v285 = vunpack.c.l.b16 %v70
    %v286 = vunpack.c.l.b16 %v71
    %v287 = vunpack.c.l.b16 %v72
    %v288 = vunpack.c.l.b16 %v73
    %v289 = vunpack.c.l.b16 %v74
    %v290 = vunpack.c.l.b16 %v75
    %v291 = vunpack.c.l.b16 %v76
    %v292 = vunpack.c.l.b16 %v77
    %v293 = vunpack.c.l.b16 %v78
    %v294 = vunpack.c.l.b16 %v79
    %v295 = vunpack.c.l.b16 %v80
    %v296 = vunpack.c.l.b16 %v81
    %v297 = vunpack.c.l.b16 %v82
    %v298 = vunpack.c.l.b16 %v83
    %v299 = vunpack.c.l.b16 %v84
    %v300 = vunpack.c.l.b16 %v85
    %v301 = vunpack.c.l.b16 %v86
    %v302 = vunpack.c.l.b16 %v87
    %v303 = vunpack.c.l.b16 %v88
    %v304 = vunpack.c.l.b16 %v89
    %v305 = vunpack.c.l.b16 %v90
    %v306 = vunpack.c.l.b16 %v91
    %v307 = vunpack.c.l.b16 %v92
    %v308 = vunpack.c.l.b16 %v93
    %v309 = vunpack.c.l.b16 %v94
    %v310 = vunpack.c.l.b16 %v95
    %v311 = vunpack.c.l.b16 %v96
    %v312 = vunpack.c.l.b16 %v97
    %v313 = vunpack.c.l.b16 %v98
    %v314 = vunpack.c.l.b16 %v99
    %v315 = vunpack.c.l.b16 %v100
    %v316 = vunpack.c.l.b16 %v101
    %v317 = vunpack.c.l.b16 %v102
    %v318 = vunpack.c.l.b16 %v103
    %v319 = vunpack.c.l.b16 %v104
    %v320 = vunpack.c.l.b16 %v105
    %v321 = vunpack.c.l.b16 %v106
    %v322 = vunpack.c.l.b16 %v107
    %v323 = vunpack.c.l.b16 %v108
    %v324 = vunpack.c.l.b16 %v109
    %v325 = vunpack.c.l.b16 %v110
    %v326 = vunpack.c.l.b16 %v111
    %v327 = vunpack.c.l.b16 %v112
    %v328 = vunpack.c.l.b16 %v113
    %v329 = vunpack.c.l.b16 %v114
    %v330 = vunpack.c.l.b16 %v115
    %v331 = vpack.c.b16 %v268, %v267
    %v332 = vpack.c.b16 %v270, %v269
    %v333 = vpack.c.b16 %v272, %v271
    %v334 = vpack.c.b16 %v274, %v273
    %v335 = vpack.c.b16 %v276, %v275
    %v336 = vpack.c.b16 %v278, %v277
    %v337 = vpack.c.b16 %v280, %v279
    %v338 = vpack.c.b16 %v282, %v281
    %v339 = vpack.c.b16 %v284, %v283
    %v340 = vpack.c.b16 %v286, %v285
    %v341 = vpack.c.b16 %v288, %v287
    %v342 = vpack.c.b16 %v290, %v289
    %v343 = vpack.c.b16 %v292, %v291
    %v344 = vpack.c.b16 %v294, %v293
    %v345 = vpack.c.b16 %v296, %v295
    %v346 = vpack.c.b16 %v298, %v297
    %v347 = vpack.c.b16 %v300, %v299
    %v348 = vpack.c.b16 %v302, %v301
    %v349 = vpack.c.b16 %v304, %v303
    %v350 = vpack.c.b16 %v306, %v305
    %v351 = vpack.c.b16 %v308, %v307
    %v352 = vpack.c.b16 %v310, %v309
    %v353 = vpack.c.b16 %v312, %v311
    %v354 = vpack.c.b16 %v314, %v313
    %v355 = vpack.c.b16 %v316, %v315
    %v356 = vpack.c.b16 %v318, %v317
    %v357 = vpack.c.b16 %v320, %v319
    %v358 = vpack.c.b16 %v322, %v321
    %v359 = vpack.c.b16 %v324, %v323
    %v360 = vpack.c.b16 %v326, %v325
    %v361 = vpack.c.b16 %v328, %v327
    %v362 = vpack.c.b16 %v330, %v329
    %395 = vmatprep.subr.bf16.mxu0 0
    %396 = vmatpush1.bf16.msra.mxu0 %v338
    %397 = vmatprep.subr.bf16.mxu0 0
    %398 = vmatpush1.bf16.msra.mxu0 %v337
    %399 = vmatprep.subr.bf16.mxu0 0
    %400 = vmatpush1.bf16.msra.mxu0 %v336
    %401 = vmatprep.subr.bf16.mxu0 0
    %402 = vmatpush1.bf16.msra.mxu0 %v335
    %403 = vmatprep.subr.bf16.mxu0 0
    %404 = vmatpush1.bf16.msra.mxu0 %v334
    %405 = vmatprep.subr.bf16.mxu0 0
    %406 = vmatpush1.bf16.msra.mxu0 %v333
    %407 = vmatprep.subr.bf16.mxu0 0
    %408 = vmatpush1.bf16.msra.mxu0 %v332
    %409 = vmatprep.subr.bf16.mxu0 0
    %410 = vmatpush1.bf16.msra.mxu0 %v331
    %411 = vmatprep.subr.bf16.mxu0 0
    %412 = vmatpush2.bf16.msra.mxu0 %v346
    %413 = vmatprep.subr.bf16.mxu0 0
    %414 = vmatpush2.bf16.msra.mxu0 %v345
    %415 = vmatprep.subr.bf16.mxu0 0
    %416 = vmatpush2.bf16.msra.mxu0 %v344
    %417 = vmatprep.subr.bf16.mxu0 0
    %418 = vmatpush2.bf16.msra.mxu0 %v343
    %419 = vmatprep.subr.bf16.mxu0 0
    %420 = vmatpush2.bf16.msra.mxu0 %v342
    %421 = vmatprep.subr.bf16.mxu0 0
    %422 = vmatpush2.bf16.msra.mxu0 %v341
    %423 = vmatprep.subr.bf16.mxu0 0
    %424 = vmatpush2.bf16.msra.mxu0 %v340
    %425 = vmatprep.subr.bf16.mxu0 0
    %426 = vmatpush2.bf16.msra.mxu0 %v339
    %427 = vmatprep.mubr.bf16.mxu0 %v197
    %428 = vmatmul.mubr.bf16.gmra.mxu0 %v195
    %v429 = vpop.f32.mrf.mxu0
    %v430 = vadd.f32 %v121, %v429
    %v431 = vpop.f32.mrf.mxu0
    %v432 = vpop.f32.mrf.mxu0
    %v433 = vadd.f32 %v121, %v432
    %v434 = vpop.f32.mrf.mxu0
    %435 = vdwg.mxu0
    %436 = vmatprep.subr.bf16.mxu0 0
    %437 = vmatpush1.bf16.msra.mxu0 %v354
    %438 = vmatprep.subr.bf16.mxu0 0
    %439 = vmatpush1.bf16.msra.mxu0 %v353
    %440 = vmatprep.subr.bf16.mxu0 0
    %441 = vmatpush1.bf16.msra.mxu0 %v352
    %442 = vmatprep.subr.bf16.mxu0 0
    %443 = vmatpush1.bf16.msra.mxu0 %v351
    %444 = vmatprep.subr.bf16.mxu0 0
    %445 = vmatpush1.bf16.msra.mxu0 %v350
    %446 = vmatprep.subr.bf16.mxu0 0
    %447 = vmatpush1.bf16.msra.mxu0 %v349
    %448 = vmatprep.subr.bf16.mxu0 0
    %449 = vmatpush1.bf16.msra.mxu0 %v348
    %450 = vmatprep.subr.bf16.mxu0 0
    %451 = vmatpush1.bf16.msra.mxu0 %v347
    %452 = vmatprep.subr.bf16.mxu0 0
    %453 = vmatpush2.bf16.msra.mxu0 %v362
    %454 = vmatprep.subr.bf16.mxu0 0
    %455 = vmatpush2.bf16.msra.mxu0 %v361
    %456 = vmatprep.subr.bf16.mxu0 0
    %457 = vmatpush2.bf16.msra.mxu0 %v360
    %458 = vmatprep.subr.bf16.mxu0 0
    %459 = vmatpush2.bf16.msra.mxu0 %v359
    %460 = vmatprep.subr.bf16.mxu0 0
    %461 = vmatpush2.bf16.msra.mxu0 %v358
    %462 = vmatprep.subr.bf16.mxu0 0
    %463 = vmatpush2.bf16.msra.mxu0 %v357
    %464 = vmatprep.subr.bf16.mxu0 0
    %465 = vmatpush2.bf16.msra.mxu0 %v356
    %466 = vmatprep.subr.bf16.mxu0 0
    %467 = vmatpush2.bf16.msra.mxu0 %v355
    %468 = vmatprep.mubr.bf16.mxu0 %v198
    %469 = vmatmul.mubr.bf16.gmra.mxu0 %v196
    %v470 = vpop.f32.mrf.mxu0
    %v471 = vadd.f32 %v430, %v470
    %v472 = vpop.f32.mrf.mxu0
    %v473 = vpop.f32.mrf.mxu0
    %v474 = vadd.f32 %v433, %v473
    %v475 = vpop.f32.mrf.mxu0
    %476 = vdwg.mxu0
    %v477 = vpack.c.bf16 %v474, %v471
    %v479 = vcombine.high %v477, %v477
    %v481 = vunpack.c.l.s4 1966171168
    %v482 = vunpack.c.0.s8 %v481
    %v483 = vlaneseq
    %v484 = vshrl.u32 %v483, 7
    %v485 = vsub.s32 %v482, %v484
    %v486 = vrot.slane %v477, %v485
    %v488 = vunpack.c.l.s4 1966171168
    %v489 = vunpack.c.0.s8 %v488
    %v490 = vlaneseq
    %v491 = vshrl.u32 %v490, 7
    %v492 = vsub.s32 %v489, %v491
    %v493 = vrot.slane %v479, %v492
    %v494 = vcombine.high %v486, %v486
    %v495 = vcombine.high %v493, %v493
    %v497 = vunpack.c.l.s4 1966171168
    %v498 = vunpack.c.0.s8 %v497
    %v499 = vlaneseq
    %v500 = vshrl.u32 %v499, 7
    %v501 = vsub.s32 %v498, %v500
    %v502 = vrot.slane %v486, %v501
    %v504 = vunpack.c.l.s4 1966171168
    %v505 = vunpack.c.0.s8 %v504
    %v506 = vlaneseq
    %v507 = vshrl.u32 %v506, 7
    %v508 = vsub.s32 %v505, %v507
    %v509 = vrot.slane %v493, %v508
    %v511 = vunpack.c.l.s4 1966171168
    %v512 = vunpack.c.0.s8 %v511
    %v513 = vlaneseq
    %v514 = vshrl.u32 %v513, 7
    %v515 = vsub.s32 %v512, %v514
    %v516 = vrot.slane %v494, %v515
    %v518 = vunpack.c.l.s4 1966171168
    %v519 = vunpack.c.0.s8 %v518
    %v520 = vlaneseq
    %v521 = vshrl.u32 %v520, 7
    %v522 = vsub.s32 %v519, %v521
    %v523 = vrot.slane %v495, %v522
    %v524 = vcombine.high %v502, %v502
    %v525 = vcombine.high %v509, %v509
    %v526 = vcombine.high %v516, %v516
    %v527 = vcombine.high %v523, %v523
    %536 = vst [vmem:[#allocation7] sm:$0x1] %v502
    %537 = vst [vmem:[#allocation7 + $0x1] sm:$0x1] %v516
    %538 = vst [vmem:[#allocation7 + $0x2] sm:$0x1] %v524
    %539 = vst [vmem:[#allocation7 + $0x3] sm:$0x1] %v526
    %540 = vst [vmem:[#allocation7 + $0x4] sm:$0x1] %v509
    %541 = vst [vmem:[#allocation7 + $0x5] sm:$0x1] %v523
    %542 = vst [vmem:[#allocation7 + $0x6] sm:$0x1] %v525
    %543 = vst [vmem:[#allocation7 + $0x7] sm:$0x1] %v527
    // Predicated region
    $region22: #{tpu_custom_call.1} parent=1 // pred_check
      _
    $region23: #{tpu_custom_call.1} parent=1 // pred_check_branch
      %545 = sbr.rel (0) target = $region25
    $region24: #{tpu_custom_call.1} parent=1 // pred_region
      %s547 = ssub.s32 128, 16
      %548 = vsyncadd [#allocation4], %s547
      %s549 = sshll.u32 [#allocation7], 4
      %s550 = int_to_ptr.vmem [resolvable:$true] %s549
      %555 = dma.vmem_to_hbm [thread:$0]  %s550, 16, %s3, [#allocation4], 16, 16, 1
    $region25: #{tpu_custom_call.1} parent=1 // pred_fallthru
      _
    // Predicated region
    $region26: #{tpu_custom_call.1} parent=1 // pred_check
      _
    $region27: #{tpu_custom_call.1} parent=1 // pred_check_branch
      %557 = sbr.rel (0) target = $region29
    $region28: #{tpu_custom_call.1} parent=1 // pred_region
      %558 = dma.done [#allocation4], 128
    $region29: #{tpu_custom_call.1} parent=1 // pred_fallthru
      _
    %559 = vsyncpa [#allocation3], 1
    %560 = vsyncpa [#allocation6], 1
    %561 = vsyncpa [#allocation4], 1

</llo_original>
